<compile_context>
chip_gen: v5e
topology: v5e:2x2
jax: 0.10.0
libtpu: 0.0.40
codegen_flags: <defaults>
</compile_context>

<pallas_src>
import functools

import numpy as np
import jax
import jax.numpy as jnp
from jax.experimental import pallas as pl
from jax.experimental.pallas import tpu as pltpu


def _default_vmem_limit():
    """Per-generation scoped-VMEM budget: min(96 MiB, physical VMEM / 2)."""
    try:
        cap = getattr(pltpu.get_tpu_info(), "vmem_capacity_bytes", None)
        if cap:
            return int(min(96 * 1024 * 1024, int(cap) // 2))
    except Exception:
        pass
    return 32 * 1024 * 1024


_VMEM_LIMIT = _default_vmem_limit()


# ----------------------------------------------------------------------------
# Pallas kernels
# ----------------------------------------------------------------------------

def _conv_direct_kernel(x_ref, w_ref, s_ref, b_ref, *rest,
                        taps, th, Wo, cin, fuse_k, relu, residual):
    """Direct conv on a padded, phase-split feature map (one output-row tile).

    x_ref : (P, Hq, Wq, Cin)   padded / phase-split image (resident across rows)
    w_ref : (kh*kw*Cin, Cout)  if fuse_k else (kh*kw, Cin, Cout)   (bf16)
    s_ref, b_ref : (1, Cout)   BatchNorm scale / shift (f32)
    id_ref (opt, input) : (th, Wo, Cout)   residual identity row tile
    o_ref : (th, Wo, Cout)
    lhs_ref (opt, scratch) : (th*Wo, kh*kw*Cin)   fused-K staging buffer
    """
    idx = 0
    if residual:
        id_ref = rest[idx]
        idx += 1
    o_ref = rest[idx]
    idx += 1
    lhs_ref = rest[idx] if fuse_k else None

    row0 = pl.program_id(1) * th

    def tap(ph, i0, j0):
        v = x_ref[ph, pl.ds(row0 + i0, th), pl.ds(j0, Wo), :]
        return v.reshape(th * Wo, cin)

    if fuse_k:
        # Stage all taps side by side along K and issue ONE deep MXU dot.
        for t, (ph, i0, j0) in enumerate(taps):
            lhs_ref[:, t * cin:(t + 1) * cin] = tap(ph, i0, j0)
        acc = jnp.dot(lhs_ref[...], w_ref[...],
                      preferred_element_type=jnp.float32)
    else:
        # Cin >= 256: each tap already saturates MXU depth -> per-tap chain.
        acc = None
        for t, (ph, i0, j0) in enumerate(taps):
            d = jnp.dot(tap(ph, i0, j0), w_ref[t],
                        preferred_element_type=jnp.float32)
            acc = d if acc is None else acc + d

    acc = acc * s_ref[...] + b_ref[...]
    if residual:
        acc = acc + id_ref[...].reshape(acc.shape).astype(jnp.float32)
    if relu:
        acc = jnp.maximum(acc, 0.0)
    o_ref[...] = acc.reshape(o_ref.shape).astype(o_ref.dtype)


def _maxpool_kernel(x_ref, o_ref, *, Ho, Wo):
    """3x3 stride-2 max pool on a phase-split (-inf padded) feature map."""
    r = None
    for di in range(3):
        for dj in range(3):
            ph = (di % 2) * 2 + (dj % 2)
            v = x_ref[ph, pl.ds(di // 2, Ho), pl.ds(dj // 2, Wo), :]
            r = v if r is None else jnp.maximum(r, v)
    o_ref[...] = r


def _mm_fused_kernel(x_ref, w_ref, s_ref, b_ref, *rest, relu, residual):
    """o = act((x @ w) * scale + shift [+ identity]) — tiled-M fused matmul."""
    if residual:
        id_ref, o_ref = rest
    else:
        (o_ref,) = rest
    acc = jnp.dot(x_ref[...], w_ref[...], preferred_element_type=jnp.float32)
    acc = acc * s_ref[...] + b_ref[...]
    if residual:
        acc = acc + id_ref[...].astype(jnp.float32)
    if relu:
        acc = jnp.maximum(acc, 0.0)
    o_ref[...] = acc.astype(o_ref.dtype)


def _gap_fc_kernel(x_ref, w_ref, b_ref, feat_ref, out_ref):
    """Fused global-average-pool + fc (both outputs written)."""
    feat = jnp.mean(x_ref[...].astype(jnp.float32), axis=1)          # (N, C)
    feat_ref[...] = feat
    out_ref[...] = (jnp.dot(feat, w_ref[...],
                            preferred_element_type=jnp.float32) + b_ref[...])


# ----------------------------------------------------------------------------
# Kernel wrappers
# ----------------------------------------------------------------------------

def matmul_bn_act(x, w, scale, shift, *, relu, identity=None,
                  out_dtype=jnp.bfloat16, tm=256):
    """Tiled-M fused matmul (weight / scale / shift resident across the grid)."""
    M, K = x.shape
    N = w.shape[1]
    tm = min(tm, M)
    if tm != M:
        tm = max(8, (tm // 8) * 8)
    grid = (pl.cdiv(M, tm),)
    kernel = functools.partial(_mm_fused_kernel, relu=relu,
                               residual=identity is not None)
    in_specs = [
        pl.BlockSpec((tm, K), lambda i: (i, 0)),
        pl.BlockSpec((K, N), lambda i: (0, 0)),      # weight resident in VMEM
        pl.BlockSpec((1, N), lambda i: (0, 0)),
        pl.BlockSpec((1, N), lambda i: (0, 0)),
    ]
    args = [x, w, scale, shift]
    if identity is not None:
        in_specs.append(pl.BlockSpec((tm, N), lambda i: (i, 0)))
        args.append(identity)
    return pl.pallas_call(
        kernel,
        grid=grid,
        in_specs=in_specs,
        out_specs=pl.BlockSpec((tm, N), lambda i: (i, 0)),
        out_shape=jax.ShapeDtypeStruct((M, N), out_dtype),
        compiler_params=pltpu.CompilerParams(
            dimension_semantics=("parallel",),
            vmem_limit_bytes=_VMEM_LIMIT),
    )(*args)


def _pad_and_phase_split(x, pad, stride, pad_value=0.0):
    """(N,H,W,C) -> (N, stride*stride, Hq, Wq, C) padded + phase-split.

    Phase ph = (row%stride)*stride + (col%stride), so every conv/pool tap
    becomes a *contiguous* static slice of one phase inside the kernel.
    """
    N, H, W, C = x.shape
    Hp, Wp = H + 2 * pad, W + 2 * pad
    eh, ew = (-Hp) % stride, (-Wp) % stride
    xp = jnp.pad(x, ((0, 0), (pad, pad + eh), (pad, pad + ew), (0, 0)),
                 constant_values=pad_value)
    Hq, Wq = (Hp + eh) // stride, (Wp + ew) // stride
    if stride == 1:
        return xp[:, None], Hq, Wq
    xp = xp.reshape(N, Hq, stride, Wq, stride, C)
    xp = xp.transpose(0, 2, 4, 1, 3, 5).reshape(N, stride * stride, Hq, Wq, C)
    return xp, Hq, Wq


def _pick_row_tile(Ho, Wo, target=2048):
    """Largest divisor of Ho whose tile has <= `target` output pixels."""
    th = 1
    for cand in range(1, Ho + 1):
        if Ho % cand == 0 and cand * Wo <= target:
            th = cand
    return th


def _conv_bn_direct(x, w, scale, shift, kh, kw, stride, pad, relu, identity):
    N, H, W, C = x.shape
    Cout = w.shape[-1]
    Ho = (H + 2 * pad - kh) // stride + 1
    Wo = (W + 2 * pad - kw) // stride + 1
    xph, Hq, Wq = _pad_and_phase_split(x, pad, stride)
    P = stride * stride
    taps = tuple(((di % stride) * stride + (dj % stride), di // stride, dj // stride)
                 for di in range(kh) for dj in range(kw))
    fuse_k = C < 256          # K-fuse taps when one tap under-fills the MXU
    th = _pick_row_tile(Ho, Wo)
    nrt = Ho // th

    if fuse_k:
        w_arg = w.reshape(kh * kw * C, Cout)
        w_spec = pl.BlockSpec((kh * kw * C, Cout), lambda n, r: (0, 0))
        scratch = [pltpu.VMEM((th * Wo, kh * kw * C), jnp.bfloat16)]
    else:
        w_arg = w
        w_spec = pl.BlockSpec((kh * kw, C, Cout), lambda n, r: (0, 0, 0))
        scratch = []

    kernel = functools.partial(_conv_direct_kernel, taps=taps, th=th, Wo=Wo,
                               cin=C, fuse_k=fuse_k, relu=relu,
                               residual=identity is not None)
    in_specs = [
        # whole padded image stays resident across the row axis
        pl.BlockSpec((None, P, Hq, Wq, C), lambda n, r: (n, 0, 0, 0, 0)),
        w_spec,
        pl.BlockSpec((1, Cout), lambda n, r: (0, 0)),
        pl.BlockSpec((1, Cout), lambda n, r: (0, 0)),
    ]
    args = [xph, w_arg, scale, shift]
    if identity is not None:
        in_specs.append(pl.BlockSpec((None, th, Wo, Cout),
                                     lambda n, r: (n, r, 0, 0)))
        args.append(identity)
    return pl.pallas_call(
        kernel,
        grid=(N, nrt),
        in_specs=in_specs,
        out_specs=pl.BlockSpec((None, th, Wo, Cout), lambda n, r: (n, r, 0, 0)),
        out_shape=jax.ShapeDtypeStruct((N, Ho, Wo, Cout), jnp.bfloat16),
        scratch_shapes=scratch,
        compiler_params=pltpu.CompilerParams(
            dimension_semantics=("parallel", "parallel"),
            vmem_limit_bytes=_VMEM_LIMIT),
    )(*args)


def _extract_patches(x, kh, kw, stride, pad, pad_value=0.0):
    """im2col: x (N,H,W,C) -> (N,Ho,Wo,kh*kw,C) (conv1 / tiny spatial only)."""
    N, H, W, C = x.shape
    xp = jnp.pad(x, ((0, 0), (pad, pad), (pad, pad), (0, 0)),
                 constant_values=pad_value)
    Hp, Wp = H + 2 * pad, W + 2 * pad
    Ho = (Hp - kh) // stride + 1
    Wo = (Wp - kw) // stride + 1
    cols = []
    for i in range(kh):
        for j in range(kw):
            cols.append(xp[:, i:i + stride * Ho:stride,
                           j:j + stride * Wo:stride, :])
    return jnp.stack(cols, axis=3), Ho, Wo


def conv_bn(x, w, scale, shift, kh, kw, stride, pad, relu, identity=None):
    """Conv2d(bias=False) + BN (+residual) (+ReLU).

    Dispatch:
      * 1x1 convs: subsample (stride) + fused matmul (no phase split / 4x
        over-fetch on the stride-2 downsample branch).
      * 3x3 / 7x7 with Cin < 16 (conv1) or tiny output width: im2col + fused
        matmul (single deep-K dot).
      * otherwise: direct conv kernel with K-fused taps and row-tiled grid.
    """
    N, H, W, C = x.shape
    Cout = w.shape[-1]
    Ho = (H + 2 * pad - kh) // stride + 1
    Wo = (W + 2 * pad - kw) // stride + 1

    if kh == 1 and kw == 1 and pad == 0:
        xs = x if stride == 1 else x[:, ::stride, ::stride, :]
        xs = xs[:, :Ho, :Wo, :]
        ident2 = (identity.reshape(N * Ho * Wo, Cout)
                  if identity is not None else None)
        y = matmul_bn_act(xs.reshape(N * Ho * Wo, C), w.reshape(C, Cout),
                          scale, shift, relu=relu, identity=ident2)
        return y.reshape(N, Ho, Wo, Cout)

    if C >= 16 and Wo % 8 == 0:
        return _conv_bn_direct(x, w, scale, shift, kh, kw, stride, pad,
                               relu, identity)

    patches, Ho, Wo = _extract_patches(x, kh, kw, stride, pad)
    cols = patches.reshape(N * Ho * Wo, kh * kw * C)
    ident2 = (identity.reshape(N * Ho * Wo, Cout)
              if identity is not None else None)
    y = matmul_bn_act(cols, w.reshape(kh * kw * C, Cout), scale, shift,
                      relu=relu, identity=ident2)
    return y.reshape(N, Ho, Wo, Cout)


def maxpool_3x3_s2(x):
    N, H, W, C = x.shape
    Ho = (H + 2 - 3) // 2 + 1
    Wo = (W + 2 - 3) // 2 + 1
    xph, Hq, Wq = _pad_and_phase_split(x, 1, 2, pad_value=-jnp.inf)
    kernel = functools.partial(_maxpool_kernel, Ho=Ho, Wo=Wo)
    return pl.pallas_call(
        kernel,
        grid=(N,),
        in_specs=[pl.BlockSpec((None, 4, Hq, Wq, C), lambda n: (n, 0, 0, 0, 0))],
        out_specs=pl.BlockSpec((None, Ho, Wo, C), lambda n: (n, 0, 0, 0)),
        out_shape=jax.ShapeDtypeStruct((N, Ho, Wo, C), x.dtype),
        compiler_params=pltpu.CompilerParams(
            dimension_semantics=("parallel",),
            vmem_limit_bytes=_VMEM_LIMIT),
    )(xph)


def gap_fc(x, w, b):
    """Fused global-average-pool + fc. Returns (feature (N,C), fc out (N,Nout))."""
    N, H, W, C = x.shape
    Nout = w.shape[1]
    xf = x.reshape(N, H * W, C)
    return pl.pallas_call(
        _gap_fc_kernel,
        grid=(1,),
        in_specs=[pl.BlockSpec((N, H * W, C), lambda i: (0, 0, 0)),
                  pl.BlockSpec((C, Nout), lambda i: (0, 0)),
                  pl.BlockSpec((1, Nout), lambda i: (0, 0))],
        out_specs=[pl.BlockSpec((N, C), lambda i: (0, 0)),
                   pl.BlockSpec((N, Nout), lambda i: (0, 0))],
        out_shape=(jax.ShapeDtypeStruct((N, C), jnp.float32),
                   jax.ShapeDtypeStruct((N, Nout), jnp.float32)),
        compiler_params=pltpu.CompilerParams(vmem_limit_bytes=_VMEM_LIMIT),
    )(xf, w, b)


# ----------------------------------------------------------------------------
# Deterministic parameter init (matches BGMotionPredictor.__init__ structure)
# ----------------------------------------------------------------------------

def _bn_params(c):
    eps = 1e-5
    gamma = jnp.ones((1, c), jnp.float32)
    beta = jnp.zeros((1, c), jnp.float32)
    mean = jnp.zeros((1, c), jnp.float32)
    var = jnp.ones((1, c), jnp.float32)
    scale = gamma / jnp.sqrt(var + eps)
    shift = beta - mean * scale
    return scale, shift


def _conv_weight(key, kh, kw, cin, cout):
    fan_in = kh * kw * cin
    std = float(np.sqrt(2.0 / fan_in))
    w = jax.random.normal(key, (kh * kw, cin, cout), jnp.float32) * std
    return w.astype(jnp.bfloat16)        # bf16 weights for the MXU


def init_bg_motion_predictor_params(key):
    keys = iter(jax.random.split(key, 64))
    p = {}
    # resnet18 stem with conv1 = Conv2d(6, 64, 7x7, s2, p3, bias=False)
    p["conv1_w"] = _conv_weight(next(keys), 7, 7, 6, 64)
    p["bn1"] = _bn_params(64)
    layers = []
    cfg = [(64, 64, 1), (64, 128, 2), (128, 256, 2), (256, 512, 2)]
    for cin, cout, stride in cfg:
        blocks = []
        for b in range(2):
            s = stride if b == 0 else 1
            bcin = cin if b == 0 else cout
            blk = {
                "w1": _conv_weight(next(keys), 3, 3, bcin, cout),
                "bn1": _bn_params(cout),
                "w2": _conv_weight(next(keys), 3, 3, cout, cout),
                "bn2": _bn_params(cout),
                "stride": s,
            }
            if s != 1 or bcin != cout:   # 1x1 downsample conv + BN
                blk["wd"] = _conv_weight(next(keys), 1, 1, bcin, cout)
                blk["bnd"] = _bn_params(cout)
            blocks.append(blk)
        layers.append(blocks)
    p["layers"] = layers
    # fc: Linear(512, 6) with weight.zero_() and bias = [1,0,0,0,1,0].
    # Padded to 128 output lanes (lane-friendly stores); sliced to 6 outside.
    p["fc_w"] = jnp.zeros((512, 128), jnp.float32)
    p["fc_b"] = jnp.zeros((1, 128), jnp.float32).at[0, :6].set(
        jnp.array([1., 0., 0., 0., 1., 0.], jnp.float32))
    return p


# ----------------------------------------------------------------------------
# Forward pass (BGMotionPredictor.forward, scale_factor == 1)
# ----------------------------------------------------------------------------

def bg_encoder(params, x):
    """resnet18 encoder: conv stack -> (pooled feature (B,512), fc out (B,128))."""
    s1, b1 = params["bn1"]
    x = conv_bn(x, params["conv1_w"], s1, b1, 7, 7, 2, 3, relu=True)
    x = maxpool_3x3_s2(x)
    for blocks in params["layers"]:
        for blk in blocks:
            stride = blk["stride"]
            if "wd" in blk:
                sd, bd = blk["bnd"]
                identity = conv_bn(x, blk["wd"], sd, bd, 1, 1, stride, 0,
                                   relu=False)
            else:
                identity = x
            s_1, b_1 = blk["bn1"]
            s_2, b_2 = blk["bn2"]
            out = conv_bn(x, blk["w1"], s_1, b_1, 3, 3, stride, 1, relu=True)
            # second conv: BN + residual add + ReLU fused in the epilogue
            x = conv_bn(out, blk["w2"], s_2, b_2, 3, 3, 1, 1, relu=True,
                        identity=identity)
    feat, pred = gap_fc(x, params["fc_w"], params["fc_b"])
    return feat, pred


def bg_motion_predictor_forward(params, source_image, driving_image):
    """Returns (out (B,3,3) affine matrices, pooled encoder feature (B,512))."""
    x = jnp.concatenate([source_image, driving_image], axis=1)    # (B, 6, H, W)
    x = jnp.transpose(x, (0, 2, 3, 1)).astype(jnp.bfloat16)       # NHWC bf16
    bs = x.shape[0]
    feat, pred = bg_encoder(params, x)
    pred = pred[:, :6]
    # out = eye(3) per batch; out[:, :2, :] = prediction.view(bs, 2, 3)
    top = pred.reshape(bs, 2, 3)
    bottom = jnp.broadcast_to(jnp.array([[[0., 0., 1.]]], jnp.float32),
                              (bs, 1, 3))
    out = jnp.concatenate([top, bottom], axis=1)                  # (B, 3, 3)
    return out, feat


# ----------------------------------------------------------------------------
# Pure-JAX (XLA) reference for the encoder feature path
# ----------------------------------------------------------------------------

def _ref_encoder_features(params, x_f32):
    def conv(x, w, stride, pad):
        kk, cin, cout = w.shape
        k = int(round(kk ** 0.5))
        w4 = w.astype(jnp.float32).reshape(k, k, cin, cout)
        return jax.lax.conv_general_dilated(
            x, w4, window_strides=(stride, stride),
            padding=((pad, pad), (pad, pad)),
            dimension_numbers=("NHWC", "HWIO", "NHWC"))

    def bn(x, sb):
        s, b = sb
        return x * s.reshape(1, 1, 1, -1) + b.reshape(1, 1, 1, -1)

    x = x_f32
    x = jax.nn.relu(bn(conv(x, params["conv1_w"], 2, 3), params["bn1"]))
    x = jax.lax.reduce_window(x, -jnp.inf, jax.lax.max,
                              (1, 3, 3, 1), (1, 2, 2, 1),
                              ((0, 0), (1, 1), (1, 1), (0, 0)))
    for blocks in params["layers"]:
        for blk in blocks:
            s = blk["stride"]
            identity = x
            if "wd" in blk:
                identity = bn(conv(x, blk["wd"], s, 0), blk["bnd"])
            out = jax.nn.relu(bn(conv(x, blk["w1"], s, 1), blk["bn1"]))
            out = bn(conv(out, blk["w2"], 1, 1), blk["bn2"])
            x = jax.nn.relu(out + identity)
    return jnp.mean(x, axis=(1, 2))


# ----------------------------------------------------------------------------

if __name__ == "__main__":
    key = jax.random.PRNGKey(0)
    kp, ks, kd = jax.random.split(key, 3)
    params = init_bg_motion_predictor_params(kp)

    # 64x64 keeps the test small but exercises both conv paths
    # (direct K-fused kernel for layer1/2, im2col fallback for layer3/4).
    B, C, H, W = 2, 3, 64, 64
    source = jax.random.normal(ks, (B, C, H, W), jnp.float32)
    driving = jax.random.normal(kd, (B, C, H, W), jnp.float32)

    out, feat = bg_motion_predictor_forward(params, source, driving)
    out = jax.block_until_ready(out)
    feat = np.asarray(jax.block_until_ready(feat))

    assert out.shape == (B, 3, 3), out.shape
    # fc.weight is zeroed and bias = [1,0,0,0,1,0] -> identity transforms.
    np.testing.assert_allclose(
        np.asarray(out),
        np.tile(np.eye(3, dtype=np.float32), (B, 1, 1)),
        atol=1e-5,
    )

    # Numerically validate the conv / BN / maxpool / GAP kernels against a
    # pure-JAX reference (bf16 activation rounding is the only difference).
    x_nhwc = jnp.transpose(jnp.concatenate([source, driving], axis=1),
                           (0, 2, 3, 1))
    x_ref_in = x_nhwc.astype(jnp.bfloat16).astype(jnp.float32)
    ref_feat = np.asarray(_ref_encoder_features(params, x_ref_in))
    rel = (np.linalg.norm(feat - ref_feat) /
           (np.linalg.norm(ref_feat) + 1e-8))
    assert rel < 0.1, f"encoder feature mismatch: relative L2 error {rel:.4f}"

    print("KERNEL_OK")
</pallas_src>

<mosaic_0001>
module attributes {stable_mosaic.version = 11 : i64} {
  func.func @_mm_fused_kernel(%arg0: i32, %arg1: memref<256x294xbf16, #tpu.memory_space<vmem>>, %arg2: memref<294x64xbf16, #tpu.memory_space<vmem>>, %arg3: memref<1x64xf32, #tpu.memory_space<vmem>>, %arg4: memref<1x64xf32, #tpu.memory_space<vmem>>, %arg5: memref<256x64xbf16, #tpu.memory_space<vmem>>) attributes {dimension_semantics = [#tpu.dimension_semantics<parallel>], iteration_bounds = array<i64: 8>, scalar_prefetch = 0 : i64, scratch_operands = 0 : i64, tpu.core_type = #tpu.core_type<tc>, window_params = [{transform_indices = @transform_0, window_bounds = array<i64: 256, 294>}, {pipeline_mode = #tpu.pipeline_mode<synchronous>, transform_indices = @transform_1, window_bounds = array<i64: 294, 64>}, {pipeline_mode = #tpu.pipeline_mode<synchronous>, transform_indices = @transform_2, window_bounds = array<i64: 1, 64>}, {pipeline_mode = #tpu.pipeline_mode<synchronous>, transform_indices = @transform_3, window_bounds = array<i64: 1, 64>}, {transform_indices = @transform_4, window_bounds = array<i64: 256, 64>}]} {
    %c0 = arith.constant 0 : index
    %c0_0 = arith.constant 0 : index
    %0 = vector.load %arg1[%c0, %c0_0] : memref<256x294xbf16, #tpu.memory_space<vmem>>, vector<256x294xbf16>
    %c0_1 = arith.constant 0 : index
    %c0_2 = arith.constant 0 : index
    %1 = vector.load %arg2[%c0_1, %c0_2] : memref<294x64xbf16, #tpu.memory_space<vmem>>, vector<294x64xbf16>
    %cst = arith.constant dense<0.000000e+00> : vector<256x64xf32>
    %2 = tpu.matmul %0, %1, %cst {dimension_numbers = #tpu.dot_dimension_numbers<[1], [0], [0], [1], [0, 0, 1, 1], [], []>} : vector<256x294xbf16>, vector<294x64xbf16>, vector<256x64xf32> -> vector<256x64xf32>
    %c0_3 = arith.constant 0 : index
    %c0_4 = arith.constant 0 : index
    %3 = vector.load %arg3[%c0_3, %c0_4] : memref<1x64xf32, #tpu.memory_space<vmem>>, vector<1x64xf32>
    %4 = vector.broadcast %3 : vector<1x64xf32> to vector<256x64xf32>
    %5 = arith.mulf %2, %4 : vector<256x64xf32>
    %c0_5 = arith.constant 0 : index
    %c0_6 = arith.constant 0 : index
    %6 = vector.load %arg4[%c0_5, %c0_6] : memref<1x64xf32, #tpu.memory_space<vmem>>, vector<1x64xf32>
    %7 = vector.broadcast %6 : vector<1x64xf32> to vector<256x64xf32>
    %8 = arith.addf %5, %7 : vector<256x64xf32>
    %cst_7 = arith.constant 0.000000e+00 : f32
    %9 = vector.broadcast %cst_7 : f32 to vector<256x64xf32>
    %10 = arith.maximumf %8, %9 : vector<256x64xf32>
    %11 = arith.truncf %10 : vector<256x64xf32> to vector<256x64xbf16>
    %c0_8 = arith.constant 0 : index
    %c0_9 = arith.constant 0 : index
    %12 = vector.load %arg5[%c0_8, %c0_9] : memref<256x64xbf16, #tpu.memory_space<vmem>>, vector<256x64xbf16>
    tpu.vector_store %arg5[%c0_8, %c0_9], %11 {strides = array<i32>} : memref<256x64xbf16, #tpu.memory_space<vmem>>, vector<256x64xbf16>,
    return
  }
  func.func @transform_0(%arg0: i32) -> (i32, i32) {
    %c0_i32 = arith.constant 0 : i32
    %c0_i32_0 = arith.constant 0 : i32
    return %arg0, %c0_i32 : i32, i32
  }
  func.func @transform_1(%arg0: i32) -> (i32, i32) {
    %c0_i32 = arith.constant 0 : i32
    %c0_i32_0 = arith.constant 0 : i32
    %c0_i32_1 = arith.constant 0 : i32
    return %c0_i32, %c0_i32_0 : i32, i32
  }
  func.func @transform_2(%arg0: i32) -> (i32, i32) {
    %c0_i32 = arith.constant 0 : i32
    %c0_i32_0 = arith.constant 0 : i32
    %c0_i32_1 = arith.constant 0 : i32
    return %c0_i32, %c0_i32_0 : i32, i32
  }
  func.func @transform_3(%arg0: i32) -> (i32, i32) {
    %c0_i32 = arith.constant 0 : i32
    %c0_i32_0 = arith.constant 0 : i32
    %c0_i32_1 = arith.constant 0 : i32
    return %c0_i32, %c0_i32_0 : i32, i32
  }
  func.func @transform_4(%arg0: i32) -> (i32, i32) {
    %c0_i32 = arith.constant 0 : i32
    %c0_i32_0 = arith.constant 0 : i32
    return %arg0, %c0_i32 : i32, i32
  }
}

</mosaic_0001>

<llo_original>
// kernel: tpu_custom_call.1
$region0: #{tpu_custom_call.1}
  #allocation0 [shape = 'u32[]', space=smem, size = 0x4, offset = 0x4, fixed_abs, tag = 'smem constant byte address 0x4 - core index']
  #allocation1 [shape = 'u32[72,128]{1,0:T(1,128)}', space=vmem, size = 0x9000, scoped, tag = 'internal scratch']
  %s0 = inlined_call_operand.vmem [shape: bf16[2048,294], index: 0, kind: input, shape index: {}]
  %s1 = inlined_call_operand.vmem [shape: bf16[294,64], index: 1, kind: input, shape index: {}]
  %s2 = inlined_call_operand.vmem [shape: f32[1,64], index: 2, kind: input, shape index: {}]
  %s3 = inlined_call_operand.vmem [shape: f32[1,64], index: 3, kind: input, shape index: {}]
  %s4 = inlined_call_operand.vmem [shape: bf16[2048,64], index: 4, kind: output, shape index: {}]
  %s5 = sld [smem:[#allocation0]]
  $region49: #{tpu_custom_call.1} parent=0
    _
  %s7 = ssub.s32 1, %s5
  %s8 = scalar_select 0, %s7, %s5
  loop: start=0, step=1, limit=10
  $region2: #{tpu_custom_call.1} parent=0 // loop_pre_header
    _
  $region3: #{tpu_custom_call.1} parent=0 // loop_header
    %s10 = sphi 0, %s14
    %p11 = scmp.ge.s32.totalorder %s10, 10
    %s20 = sphi 0, %s22
    %s23 = sphi 0, %s20
    %s24 = sphi 0, %s23
    %s40 = sphi 0, %s24
    %s44 = sphi 0, %s44
    %s46 = sphi 0, %s44
    %s47 = sphi 0, %s46
    %s61 = sphi 0, %s47
    %s65 = sphi 0, %s65
    %s67 = sphi 0, %s65
    %s68 = sphi 0, %s67
    %s82 = sphi 0, %s68
    %s86 = sphi 0, %s86
    %s88 = sphi 0, %s86
    %s89 = sphi 0, %s88
    %s103 = sphi 0, %s89
    %s109 = sphi 0, %s111
    %s112 = sphi 0, %s109
    %s113 = sphi 0, %s112
    %s129 = sphi 0, %s113
  $region4: #{tpu_custom_call.1} parent=0 // loop_header_branch
    %13 = sbr.rel (%p11) target = $region8
  $region5: #{tpu_custom_call.1} parent=0 // loop_body
    %s15 = ssub.s32 %s10, 1
    %s16 = ssub.s32 %s10, 2
    %s17 = sadd.s32 %s10, 1
    %s18 = ssub.s32 %s10, %s17
    %p19 = scmp.eq.s32.totalorder %s18, 0
    %s21 = sadd.s32 %s20, 1
    %s22 = scalar_select %p19, %s20, %s21
    %p25 = pneg %p19
    %p26 = scmp.eq.s32.totalorder %s10, 7
    %p27 = por %p25, %p26
    %p28 = scmp.ne.s32.totalorder %s20, %s23
    %p29 = scmp.eq.s32.totalorder %s10, 0
    %p30 = por %p28, %p29
    %p31 = scmp.ne.s32.totalorder %s20, %s23
    %p32 = scmp.eq.s32.totalorder %s15, 7
    %p33 = por %p31, %p32
    %p34 = scmp.ne.s32.totalorder %s23, %s24
    %p35 = scmp.eq.s32.totalorder %s15, 0
    %p36 = por %p34, %p35
    %p37 = scmp.ne.s32.totalorder %s23, %s24
    %p38 = scmp.eq.s32.totalorder %s16, 7
    %p39 = por %p37, %p38
    %p41 = scmp.ne.s32.totalorder %s24, %s40
    %p42 = scmp.eq.s32.totalorder %s16, 0
    %p43 = por %p41, %p42
    %s45 = sadd.s32 %s44, 1
    %p48 = scmp.eq.s32.totalorder %s10, 7
    %p49 = scmp.ne.s32.totalorder %s44, %s46
    %p50 = scmp.eq.s32.totalorder %s10, 0
    %p51 = por %p49, %p50
    %p52 = scmp.ne.s32.totalorder %s44, %s46
    %p53 = scmp.eq.s32.totalorder %s15, 7
    %p54 = por %p52, %p53
    %p55 = scmp.ne.s32.totalorder %s46, %s47
    %p56 = scmp.eq.s32.totalorder %s15, 0
    %p57 = por %p55, %p56
    %p58 = scmp.ne.s32.totalorder %s46, %s47
    %p59 = scmp.eq.s32.totalorder %s16, 7
    %p60 = por %p58, %p59
    %p62 = scmp.ne.s32.totalorder %s47, %s61
    %p63 = scmp.eq.s32.totalorder %s16, 0
    %p64 = por %p62, %p63
    %s66 = sadd.s32 %s65, 1
    %p69 = scmp.eq.s32.totalorder %s10, 7
    %p70 = scmp.ne.s32.totalorder %s65, %s67
    %p71 = scmp.eq.s32.totalorder %s10, 0
    %p72 = por %p70, %p71
    %p73 = scmp.ne.s32.totalorder %s65, %s67
    %p74 = scmp.eq.s32.totalorder %s15, 7
    %p75 = por %p73, %p74
    %p76 = scmp.ne.s32.totalorder %s67, %s68
    %p77 = scmp.eq.s32.totalorder %s15, 0
    %p78 = por %p76, %p77
    %p79 = scmp.ne.s32.totalorder %s67, %s68
    %p80 = scmp.eq.s32.totalorder %s16, 7
    %p81 = por %p79, %p80
    %p83 = scmp.ne.s32.totalorder %s68, %s82
    %p84 = scmp.eq.s32.totalorder %s16, 0
    %p85 = por %p83, %p84
    %s87 = sadd.s32 %s86, 1
    %p90 = scmp.eq.s32.totalorder %s10, 7
    %p91 = scmp.ne.s32.totalorder %s86, %s88
    %p92 = scmp.eq.s32.totalorder %s10, 0
    %p93 = por %p91, %p92
    %p94 = scmp.ne.s32.totalorder %s86, %s88
    %p95 = scmp.eq.s32.totalorder %s15, 7
    %p96 = por %p94, %p95
    %p97 = scmp.ne.s32.totalorder %s88, %s89
    %p98 = scmp.eq.s32.totalorder %s15, 0
    %p99 = por %p97, %p98
    %p100 = scmp.ne.s32.totalorder %s88, %s89
    %p101 = scmp.eq.s32.totalorder %s16, 7
    %p102 = por %p100, %p101
    %p104 = scmp.ne.s32.totalorder %s89, %s103
    %p105 = scmp.eq.s32.totalorder %s16, 0
    %p106 = por %p104, %p105
    %s107 = ssub.s32 %s10, %s17
    %p108 = scmp.eq.s32.totalorder %s107, 0
    %s110 = sadd.s32 %s109, 1
    %s111 = scalar_select %p108, %s109, %s110
    %p114 = pneg %p108
    %p115 = scmp.eq.s32.totalorder %s10, 7
    %p116 = por %p114, %p115
    %p117 = scmp.ne.s32.totalorder %s109, %s112
    %p118 = scmp.eq.s32.totalorder %s10, 0
    %p119 = por %p117, %p118
    %p120 = scmp.ne.s32.totalorder %s109, %s112
    %p121 = scmp.eq.s32.totalorder %s15, 7
    %p122 = por %p120, %p121
    %p123 = scmp.ne.s32.totalorder %s112, %s113
    %p124 = scmp.eq.s32.totalorder %s15, 0
    %p125 = por %p123, %p124
    %p126 = scmp.ne.s32.totalorder %s112, %s113
    %p127 = scmp.eq.s32.totalorder %s16, 7
    %p128 = por %p126, %p127
    %p130 = scmp.ne.s32.totalorder %s113, %s129
    %p131 = scmp.eq.s32.totalorder %s16, 0
    %p132 = por %p130, %p131
    %p133 = scmp.le.s32.totalorder 1, %s10
    %p134 = scmp.lt.s32.totalorder %s10, 9
    %p135 = pnand %p133, %p134
    %p136 = pneg %p135
    // Predicated region
    $region9: #{tpu_custom_call.1} parent=5 // pred_check
      _
    $region10: #{tpu_custom_call.1} parent=5 // pred_check_branch
      %138 = sbr.rel (%p135) target = $region12
    $region11: #{tpu_custom_call.1} parent=5 // pred_region
      %s139 = ssub.s32 %s10, 1
      // Predicated region
      $region13: #{tpu_custom_call.1} parent=11 // pred_check
        %p140 = pneg %p57
      $region14: #{tpu_custom_call.1} parent=11 // pred_check_branch
        %142 = sbr.rel (%p140) target = $region16
      $region15: #{tpu_custom_call.1} parent=11 // pred_region
        _
      $region16: #{tpu_custom_call.1} parent=11 // pred_fallthru
        _
      // Predicated region
      $region17: #{tpu_custom_call.1} parent=11 // pred_check
        %p143 = pneg %p78
      $region18: #{tpu_custom_call.1} parent=11 // pred_check_branch
        %145 = sbr.rel (%p143) target = $region20
      $region19: #{tpu_custom_call.1} parent=11 // pred_region
        _
      $region20: #{tpu_custom_call.1} parent=11 // pred_fallthru
        _
      // Predicated region
      $region21: #{tpu_custom_call.1} parent=11 // pred_check
        %p146 = pneg %p99
      $region22: #{tpu_custom_call.1} parent=11 // pred_check_branch
        %148 = sbr.rel (%p146) target = $region24
      $region23: #{tpu_custom_call.1} parent=11 // pred_region
        _
      $region24: #{tpu_custom_call.1} parent=11 // pred_fallthru
        _
    $region12: #{tpu_custom_call.1} parent=5 // pred_fallthru
      _
    %p149 = scmp.lt.s32.totalorder %s10, 8
    // Predicated region
    $region25: #{tpu_custom_call.1} parent=5 // pred_check
      %p150 = pneg %p149
    $region26: #{tpu_custom_call.1} parent=5 // pred_check_branch
      %152 = sbr.rel (%p150) target = $region28
    $region27: #{tpu_custom_call.1} parent=5 // pred_region
      // Predicated region
      $region29: #{tpu_custom_call.1} parent=27 // pred_check
        %p153 = pneg %p30
      $region30: #{tpu_custom_call.1} parent=27 // pred_check_branch
        %155 = sbr.rel (%p153) target = $region32
      $region31: #{tpu_custom_call.1} parent=27 // pred_region
        %s156 = smul.u32 32, %s10
        %p157 = scmp.lt.s32.totalorder %s156, 255
        %s158 = scalar_select %p157, %s156, 255
        %s159 = smul.addr %s158, 3
        %s160 = smul.addr %s159, 4
        %s161 = scalar_lea.vmem %s0, %s160
        %s162 = smul.u32 32, %s10
      $region32: #{tpu_custom_call.1} parent=27 // pred_fallthru
        _
    $region28: #{tpu_custom_call.1} parent=5 // pred_fallthru
      _
    %p163 = scmp.le.s32.totalorder 1, %s10
    %p164 = scmp.lt.s32.totalorder %s10, 9
    %p165 = pnand %p163, %p164
    %p166 = pneg %p165
    // Predicated region
    $region33: #{tpu_custom_call.1} parent=5 // pred_check
      _
    $region34: #{tpu_custom_call.1} parent=5 // pred_check_branch
      %168 = sbr.rel (%p165) target = $region36
    $region35: #{tpu_custom_call.1} parent=5 // pred_region
      %s169 = ssub.s32 %s10, 1
      %s170 = smul.u32 32, %s15
      %p171 = scmp.lt.s32.totalorder %s170, 255
      %s172 = scalar_select %p171, %s170, 255
      %s173 = smul.addr %s172, 3
      %s174 = smul.addr %s173, 4
      %s175 = scalar_lea.vmem %s0, %s174
      %p176 = pneg %p36
      %p177 = pneg %p33
      %p178 = pneg %p57
      %p179 = pneg %p54
      %p180 = pneg %p78
      %p181 = pneg %p75
      %p182 = pneg %p99
      %p183 = pneg %p96
      %p184 = pneg %p125
      %p185 = pneg %p122
      %s186 = smul.u32 32, %s15
      %p187 = scmp.lt.s32.totalorder %s186, 255
      %s188 = scalar_select %p187, %s186, 255
      %s189 = smul.addr %s188, 4
      %s190 = scalar_lea.vmem %s4, %s189
      %s191 = smul.u32 32, %s15
      %p192 = scmp.lt.s32.totalorder %s191, 255
      %s193 = scalar_select %p192, %s191, 255
      %s194 = smul.addr %s193, 3
      %s195 = smul.addr %s194, 4
      %s196 = scalar_lea.vmem %s0, %s195
      %s197 = smul.u32 32, %s15
      %s198 = smul.u32 32, %s15
      %p199 = scmp.lt.s32.totalorder %s198, 255
      %s200 = scalar_select %p199, %s198, 255
      %s201 = smul.addr %s200, 4
      %s202 = scalar_lea.vmem %s4, %s201
      %s203 = smul.u32 32, %s15
      %v205 = vld [vmem:[%s196] sm:$0xff]
      %v206 = vld [vmem:[%s196 + $0x8] sm:$0xf]
      %v207 = vld [vmem:[%s196 + $0xc] sm:$0xff]
      %v208 = vld [vmem:[%s196 + $0x14] sm:$0xf]
      %v209 = vld [vmem:[%s196 + $0x18] sm:$0xff]
      %v210 = vld [vmem:[%s196 + $0x20] sm:$0xf]
      %v211 = vld [vmem:[%s196 + $0x24] sm:$0xff]
      %v212 = vld [vmem:[%s196 + $0x2c] sm:$0xf]
      %v213 = vld [vmem:[%s196 + $0x30] sm:$0xff]
      %v214 = vld [vmem:[%s196 + $0x38] sm:$0xf]
      %v215 = vld [vmem:[%s196 + $0x3c] sm:$0xff]
      %v216 = vld [vmem:[%s196 + $0x44] sm:$0xf]
      %v217 = vld [vmem:[%s196 + $0x48] sm:$0xff]
      %v218 = vld [vmem:[%s196 + $0x50] sm:$0xf]
      %v219 = vld [vmem:[%s196 + $0x54] sm:$0xff]
      %v220 = vld [vmem:[%s196 + $0x5c] sm:$0xf]
      %v221 = vld [vmem:[%s196 + $0x60] sm:$0xff]
      %v222 = vld [vmem:[%s196 + $0x68] sm:$0xf]
      %v223 = vld [vmem:[%s196 + $0x6c] sm:$0xff]
      %v224 = vld [vmem:[%s196 + $0x74] sm:$0xf]
      %v225 = vld [vmem:[%s196 + $0x78] sm:$0xff]
      %v226 = vld [vmem:[%s196 + $0x80] sm:$0xf]
      %v227 = vld [vmem:[%s196 + $0x84] sm:$0xff]
      %v228 = vld [vmem:[%s196 + $0x8c] sm:$0xf]
      %v229 = vld [vmem:[%s196 + $0x90] sm:$0xff]
      %v230 = vld [vmem:[%s196 + $0x98] sm:$0xf]
      %v231 = vld [vmem:[%s196 + $0x9c] sm:$0xff]
      %v232 = vld [vmem:[%s196 + $0xa4] sm:$0xf]
      %v233 = vld [vmem:[%s196 + $0xa8] sm:$0xff]
      %v234 = vld [vmem:[%s196 + $0xb0] sm:$0xf]
      %v235 = vld [vmem:[%s196 + $0xb4] sm:$0xff]
      %v236 = vld [vmem:[%s196 + $0xbc] sm:$0xf]
      %v237 = vld [vmem:[%s196 + $0xc0] sm:$0xff]
      %v238 = vld [vmem:[%s196 + $0xc8] sm:$0xf]
      %v239 = vld [vmem:[%s196 + $0xcc] sm:$0xff]
      %v240 = vld [vmem:[%s196 + $0xd4] sm:$0xf]
      %v241 = vld [vmem:[%s196 + $0xd8] sm:$0xff]
      %v242 = vld [vmem:[%s196 + $0xe0] sm:$0xf]
      %v243 = vld [vmem:[%s196 + $0xe4] sm:$0xff]
      %v244 = vld [vmem:[%s196 + $0xec] sm:$0xf]
      %v245 = vld [vmem:[%s196 + $0xf0] sm:$0xff]
      %v246 = vld [vmem:[%s196 + $0xf8] sm:$0xf]
      %v247 = vld [vmem:[%s196 + $0xfc] sm:$0xff]
      %v248 = vld [vmem:[%s196 + $0x104] sm:$0xf]
      %v249 = vld [vmem:[%s196 + $0x108] sm:$0xff]
      %v250 = vld [vmem:[%s196 + $0x110] sm:$0xf]
      %v251 = vld [vmem:[%s196 + $0x114] sm:$0xff]
      %v252 = vld [vmem:[%s196 + $0x11c] sm:$0xf]
      %v253 = vld [vmem:[%s196 + $0x120] sm:$0xff]
      %v254 = vld [vmem:[%s196 + $0x128] sm:$0xf]
      %v255 = vld [vmem:[%s196 + $0x12c] sm:$0xff]
      %v256 = vld [vmem:[%s196 + $0x134] sm:$0xf]
      %v257 = vld [vmem:[%s196 + $0x138] sm:$0xff]
      %v258 = vld [vmem:[%s196 + $0x140] sm:$0xf]
      %v259 = vld [vmem:[%s196 + $0x144] sm:$0xff]
      %v260 = vld [vmem:[%s196 + $0x14c] sm:$0xf]
      %v261 = vld [vmem:[%s196 + $0x150] sm:$0xff]
      %v262 = vld [vmem:[%s196 + $0x158] sm:$0xf]
      %v263 = vld [vmem:[%s196 + $0x15c] sm:$0xff]
      %v264 = vld [vmem:[%s196 + $0x164] sm:$0xf]
      %v265 = vld [vmem:[%s196 + $0x168] sm:$0xff]
      %v266 = vld [vmem:[%s196 + $0x170] sm:$0xf]
      %v267 = vld [vmem:[%s196 + $0x174] sm:$0xff]
      %v268 = vld [vmem:[%s196 + $0x17c] sm:$0xf]
      %v269 = vld [vmem:[%s1] sm:$0xf]
      %v270 = vld [vmem:[%s1 + $0x4] sm:$0xf]
      %v271 = vld [vmem:[%s1 + $0x8] sm:$0xf]
      %v272 = vld [vmem:[%s1 + $0xc] sm:$0xf]
      %v273 = vld [vmem:[%s1 + $0x10] sm:$0xf]
      %v274 = vld [vmem:[%s1 + $0x14] sm:$0xf]
      %v275 = vld [vmem:[%s1 + $0x18] sm:$0xf]
      %v276 = vld [vmem:[%s1 + $0x1c] sm:$0xf]
      %v277 = vld [vmem:[%s1 + $0x20] sm:$0xf]
      %v278 = vld [vmem:[%s1 + $0x24] sm:$0xf]
      %v279 = vld [vmem:[%s1 + $0x28] sm:$0xf]
      %v280 = vld [vmem:[%s1 + $0x2c] sm:$0xf]
      %v281 = vld [vmem:[%s1 + $0x30] sm:$0xf]
      %v282 = vld [vmem:[%s1 + $0x34] sm:$0xf]
      %v283 = vld [vmem:[%s1 + $0x38] sm:$0xf]
      %v284 = vld [vmem:[%s1 + $0x3c] sm:$0xf]
      %v285 = vld [vmem:[%s1 + $0x40] sm:$0xf]
      %v286 = vld [vmem:[%s1 + $0x44] sm:$0xf]
      %v287 = vld [vmem:[%s1 + $0x48] sm:$0xf]
      %v288 = vld [vmem:[%s1 + $0x4c] sm:$0xf]
      %v289 = vld [vmem:[%s1 + $0x50] sm:$0xf]
      %v290 = vld [vmem:[%s1 + $0x54] sm:$0xf]
      %v291 = vld [vmem:[%s1 + $0x58] sm:$0xf]
      %v292 = vld [vmem:[%s1 + $0x5c] sm:$0xf]
      %v293 = vld [vmem:[%s1 + $0x60] sm:$0xf]
      %v294 = vld [vmem:[%s1 + $0x64] sm:$0xf]
      %v295 = vld [vmem:[%s1 + $0x68] sm:$0xf]
      %v296 = vld [vmem:[%s1 + $0x6c] sm:$0xf]
      %v297 = vld [vmem:[%s1 + $0x70] sm:$0xf]
      %v298 = vld [vmem:[%s1 + $0x74] sm:$0xf]
      %v299 = vld [vmem:[%s1 + $0x78] sm:$0xf]
      %v300 = vld [vmem:[%s1 + $0x7c] sm:$0xf]
      %v301 = vld [vmem:[%s1 + $0x80] sm:$0xf]
      %v302 = vld [vmem:[%s1 + $0x84] sm:$0xf]
      %v303 = vld [vmem:[%s1 + $0x88] sm:$0xf]
      %v304 = vld [vmem:[%s1 + $0x8c] sm:$0xf]
      %v305 = vld [vmem:[%s1 + $0x90] sm:$0x7]
      %v370 = vunpack.c.l.b16 %v205
      %v371 = vunpack.c.h.b16 %v205
      %v372 = vunpack.c.l.b16 %v206
      %v373 = vunpack.c.l.b16 %v207
      %v374 = vunpack.c.h.b16 %v207
      %v375 = vunpack.c.l.b16 %v208
      %v376 = vunpack.c.l.b16 %v209
      %v377 = vunpack.c.h.b16 %v209
      %v378 = vunpack.c.l.b16 %v210
      %v379 = vunpack.c.l.b16 %v211
      %v380 = vunpack.c.h.b16 %v211
      %v381 = vunpack.c.l.b16 %v212
      %v382 = vunpack.c.l.b16 %v213
      %v383 = vunpack.c.h.b16 %v213
      %v384 = vunpack.c.l.b16 %v214
      %v385 = vunpack.c.l.b16 %v215
      %v386 = vunpack.c.h.b16 %v215
      %v387 = vunpack.c.l.b16 %v216
      %v388 = vunpack.c.l.b16 %v217
      %v389 = vunpack.c.h.b16 %v217
      %v390 = vunpack.c.l.b16 %v218
      %v391 = vunpack.c.l.b16 %v219
      %v392 = vunpack.c.h.b16 %v219
      %v393 = vunpack.c.l.b16 %v220
      %v394 = vunpack.c.l.b16 %v221
      %v395 = vunpack.c.h.b16 %v221
      %v396 = vunpack.c.l.b16 %v222
      %v397 = vunpack.c.l.b16 %v223
      %v398 = vunpack.c.h.b16 %v223
      %v399 = vunpack.c.l.b16 %v224
      %v400 = vunpack.c.l.b16 %v225
      %v401 = vunpack.c.h.b16 %v225
      %v402 = vunpack.c.l.b16 %v226
      %v403 = vunpack.c.l.b16 %v227
      %v404 = vunpack.c.h.b16 %v227
      %v405 = vunpack.c.l.b16 %v228
      %v406 = vunpack.c.l.b16 %v229
      %v407 = vunpack.c.h.b16 %v229
      %v408 = vunpack.c.l.b16 %v230
      %v409 = vunpack.c.l.b16 %v231
      %v410 = vunpack.c.h.b16 %v231
      %v411 = vunpack.c.l.b16 %v232
      %v412 = vunpack.c.l.b16 %v233
      %v413 = vunpack.c.h.b16 %v233
      %v414 = vunpack.c.l.b16 %v234
      %v415 = vunpack.c.l.b16 %v235
      %v416 = vunpack.c.h.b16 %v235
      %v417 = vunpack.c.l.b16 %v236
      %v418 = vunpack.c.l.b16 %v237
      %v419 = vunpack.c.h.b16 %v237
      %v420 = vunpack.c.l.b16 %v238
      %v421 = vunpack.c.l.b16 %v239
      %v422 = vunpack.c.h.b16 %v239
      %v423 = vunpack.c.l.b16 %v240
      %v424 = vunpack.c.l.b16 %v241
      %v425 = vunpack.c.h.b16 %v241
      %v426 = vunpack.c.l.b16 %v242
      %v427 = vunpack.c.l.b16 %v243
      %v428 = vunpack.c.h.b16 %v243
      %v429 = vunpack.c.l.b16 %v244
      %v430 = vunpack.c.l.b16 %v245
      %v431 = vunpack.c.h.b16 %v245
      %v432 = vunpack.c.l.b16 %v246
      %v433 = vunpack.c.l.b16 %v247
      %v434 = vunpack.c.h.b16 %v247
      %v435 = vunpack.c.l.b16 %v248
      %v436 = vunpack.c.l.b16 %v249
      %v437 = vunpack.c.h.b16 %v249
      %v438 = vunpack.c.l.b16 %v250
      %v439 = vunpack.c.l.b16 %v251
      %v440 = vunpack.c.h.b16 %v251
      %v441 = vunpack.c.l.b16 %v252
      %v442 = vunpack.c.l.b16 %v253
      %v443 = vunpack.c.h.b16 %v253
      %v444 = vunpack.c.l.b16 %v254
      %v445 = vunpack.c.l.b16 %v255
      %v446 = vunpack.c.h.b16 %v255
      %v447 = vunpack.c.l.b16 %v256
      %v448 = vunpack.c.l.b16 %v257
      %v449 = vunpack.c.h.b16 %v257
      %v450 = vunpack.c.l.b16 %v258
      %v451 = vunpack.c.l.b16 %v259
      %v452 = vunpack.c.h.b16 %v259
      %v453 = vunpack.c.l.b16 %v260
      %v454 = vunpack.c.l.b16 %v261
      %v455 = vunpack.c.h.b16 %v261
      %v456 = vunpack.c.l.b16 %v262
      %v457 = vunpack.c.l.b16 %v263
      %v458 = vunpack.c.h.b16 %v263
      %v459 = vunpack.c.l.b16 %v264
      %v460 = vunpack.c.l.b16 %v265
      %v461 = vunpack.c.h.b16 %v265
      %v462 = vunpack.c.l.b16 %v266
      %v463 = vunpack.c.l.b16 %v267
      %v464 = vunpack.c.h.b16 %v267
      %v465 = vunpack.c.l.b16 %v268
      %v466 = vpack.c.b16 %v373, %v370
      %v467 = vpack.c.b16 %v374, %v371
      %v468 = vpack.c.b16 %v375, %v372
      %v469 = vpack.c.b16 %v379, %v376
      %v470 = vpack.c.b16 %v380, %v377
      %v471 = vpack.c.b16 %v381, %v378
      %v472 = vpack.c.b16 %v385, %v382
      %v473 = vpack.c.b16 %v386, %v383
      %v474 = vpack.c.b16 %v387, %v384
      %v475 = vpack.c.b16 %v391, %v388
      %v476 = vpack.c.b16 %v392, %v389
      %v477 = vpack.c.b16 %v393, %v390
      %v478 = vpack.c.b16 %v397, %v394
      %v479 = vpack.c.b16 %v398, %v395
      %v480 = vpack.c.b16 %v399, %v396
      %v481 = vpack.c.b16 %v403, %v400
      %v482 = vpack.c.b16 %v404, %v401
      %v483 = vpack.c.b16 %v405, %v402
      %v484 = vpack.c.b16 %v409, %v406
      %v485 = vpack.c.b16 %v410, %v407
      %v486 = vpack.c.b16 %v411, %v408
      %v487 = vpack.c.b16 %v415, %v412
      %v488 = vpack.c.b16 %v416, %v413
      %v489 = vpack.c.b16 %v417, %v414
      %v490 = vpack.c.b16 %v421, %v418
      %v491 = vpack.c.b16 %v422, %v419
      %v492 = vpack.c.b16 %v423, %v420
      %v493 = vpack.c.b16 %v427, %v424
      %v494 = vpack.c.b16 %v428, %v425
      %v495 = vpack.c.b16 %v429, %v426
      %v496 = vpack.c.b16 %v433, %v430
      %v497 = vpack.c.b16 %v434, %v431
      %v498 = vpack.c.b16 %v435, %v432
      %v499 = vpack.c.b16 %v439, %v436
      %v500 = vpack.c.b16 %v440, %v437
      %v501 = vpack.c.b16 %v441, %v438
      %v502 = vpack.c.b16 %v445, %v442
      %v503 = vpack.c.b16 %v446, %v443
      %v504 = vpack.c.b16 %v447, %v444
      %v505 = vpack.c.b16 %v451, %v448
      %v506 = vpack.c.b16 %v452, %v449
      %v507 = vpack.c.b16 %v453, %v450
      %v508 = vpack.c.b16 %v457, %v454
      %v509 = vpack.c.b16 %v458, %v455
      %v510 = vpack.c.b16 %v459, %v456
      %v511 = vpack.c.b16 %v463, %v460
      %v512 = vpack.c.b16 %v464, %v461
      %v513 = vpack.c.b16 %v465, %v462
      %v583 = vunpack.c.l.b16 %v269
      %v584 = vunpack.c.l.b16 %v270
      %v585 = vunpack.c.l.b16 %v271
      %v586 = vunpack.c.l.b16 %v272
      %v587 = vunpack.c.l.b16 %v273
      %v588 = vunpack.c.l.b16 %v274
      %v589 = vunpack.c.l.b16 %v275
      %v590 = vunpack.c.l.b16 %v276
      %v591 = vunpack.c.l.b16 %v277
      %v592 = vunpack.c.l.b16 %v278
      %v593 = vunpack.c.l.b16 %v279
      %v594 = vunpack.c.l.b16 %v280
      %v595 = vunpack.c.l.b16 %v281
      %v596 = vunpack.c.l.b16 %v282
      %v597 = vunpack.c.l.b16 %v283
      %v598 = vunpack.c.l.b16 %v284
      %v599 = vunpack.c.l.b16 %v285
      %v600 = vunpack.c.l.b16 %v286
      %v601 = vunpack.c.l.b16 %v287
      %v602 = vunpack.c.l.b16 %v288
      %v603 = vunpack.c.l.b16 %v289
      %v604 = vunpack.c.l.b16 %v290
      %v605 = vunpack.c.l.b16 %v291
      %v606 = vunpack.c.l.b16 %v292
      %v607 = vunpack.c.l.b16 %v293
      %v608 = vunpack.c.l.b16 %v294
      %v609 = vunpack.c.l.b16 %v295
      %v610 = vunpack.c.l.b16 %v296
      %v611 = vunpack.c.l.b16 %v297
      %v612 = vunpack.c.l.b16 %v298
      %v613 = vunpack.c.l.b16 %v299
      %v614 = vunpack.c.l.b16 %v300
      %v615 = vunpack.c.l.b16 %v301
      %v616 = vunpack.c.l.b16 %v302
      %v617 = vunpack.c.l.b16 %v303
      %v618 = vunpack.c.l.b16 %v304
      %v619 = vunpack.c.l.b16 %v305
      %v620 = vpack.c.b16 %v584, %v583
      %v621 = vpack.c.b16 %v586, %v585
      %v622 = vpack.c.b16 %v588, %v587
      %v623 = vpack.c.b16 %v590, %v589
      %v624 = vpack.c.b16 %v592, %v591
      %v625 = vpack.c.b16 %v594, %v593
      %v626 = vpack.c.b16 %v596, %v595
      %v627 = vpack.c.b16 %v598, %v597
      %v628 = vpack.c.b16 %v600, %v599
      %v629 = vpack.c.b16 %v602, %v601
      %v630 = vpack.c.b16 %v604, %v603
      %v631 = vpack.c.b16 %v606, %v605
      %v632 = vpack.c.b16 %v608, %v607
      %v633 = vpack.c.b16 %v610, %v609
      %v634 = vpack.c.b16 %v612, %v611
      %v635 = vpack.c.b16 %v614, %v613
      %v636 = vpack.c.b16 %v616, %v615
      %v637 = vpack.c.b16 %v618, %v617
      %v638 = vpack.c.b16 %v619, %v619
      %vm657 = vcmask 310272
      %v659 = vsel %vm657, %v468, 0
      %v662 = vsel %vm657, %v471, 0
      %v665 = vsel %vm657, %v474, 0
      %v668 = vsel %vm657, %v477, 0
      %v671 = vsel %vm657, %v480, 0
      %v674 = vsel %vm657, %v483, 0
      %v677 = vsel %vm657, %v486, 0
      %v680 = vsel %vm657, %v489, 0
      %v683 = vsel %vm657, %v492, 0
      %v686 = vsel %vm657, %v495, 0
      %v689 = vsel %vm657, %v498, 0
      %v692 = vsel %vm657, %v501, 0
      %v695 = vsel %vm657, %v504, 0
      %v698 = vsel %vm657, %v507, 0
      %v701 = vsel %vm657, %v510, 0
      %v704 = vsel %vm657, %v513, 0
      %vm706 = vcmask 1042432
      %v708 = vsel %vm706, %v638, 0
      %710 = vmatpush.bf16.msra.mxu0 %v627
      %711 = vmatpush.bf16.msra.mxu0 %v626
      %712 = vmatpush.bf16.msra.mxu0 %v625
      %713 = vmatpush.bf16.msra.mxu0 %v624
      %714 = vmatpush.bf16.msra.mxu0 %v623
      %715 = vmatpush.bf16.msra.mxu0 %v622
      %716 = vmatpush.bf16.msra.mxu0 %v621
      %717 = vmatpush.bf16.msra.mxu0 %v620
      %718 = vmatmul.bf16.gmra.mxu0 %v466
      %v719 = vpop.f32.mrf.mxu0
      %v720 = vadd.f32 0.0, %v719
      %v721 = vpop.f32.mrf.mxu0
      %v722 = vadd.f32 0.0, %v721
      %723 = vmatmul.bf16.gmra.mxu0 %v469
      %v724 = vpop.f32.mrf.mxu0
      %v725 = vadd.f32 0.0, %v724
      %v726 = vpop.f32.mrf.mxu0
      %v727 = vadd.f32 0.0, %v726
      %728 = vmatmul.bf16.gmra.mxu0 %v472
      %v729 = vpop.f32.mrf.mxu0
      %v730 = vadd.f32 0.0, %v729
      %v731 = vpop.f32.mrf.mxu0
      %v732 = vadd.f32 0.0, %v731
      %733 = vmatmul.bf16.gmra.mxu0 %v475
      %v734 = vpop.f32.mrf.mxu0
      %v735 = vadd.f32 0.0, %v734
      %v736 = vpop.f32.mrf.mxu0
      %v737 = vadd.f32 0.0, %v736
      %738 = vmatmul.bf16.gmra.mxu0 %v478
      %v739 = vpop.f32.mrf.mxu0
      %v740 = vadd.f32 0.0, %v739
      %v741 = vpop.f32.mrf.mxu0
      %v742 = vadd.f32 0.0, %v741
      %743 = vmatmul.bf16.gmra.mxu0 %v481
      %v744 = vpop.f32.mrf.mxu0
      %v745 = vadd.f32 0.0, %v744
      %v746 = vpop.f32.mrf.mxu0
      %v747 = vadd.f32 0.0, %v746
      %748 = vmatmul.bf16.gmra.mxu0 %v484
      %v749 = vpop.f32.mrf.mxu0
      %v750 = vadd.f32 0.0, %v749
      %v751 = vpop.f32.mrf.mxu0
      %v752 = vadd.f32 0.0, %v751
      %753 = vmatmul.bf16.gmra.mxu0 %v487
      %v754 = vpop.f32.mrf.mxu0
      %v755 = vadd.f32 0.0, %v754
      %v756 = vpop.f32.mrf.mxu0
      %v757 = vadd.f32 0.0, %v756
      %758 = vmatmul.bf16.gmra.mxu0 %v490
      %v759 = vpop.f32.mrf.mxu0
      %v760 = vadd.f32 0.0, %v759
      %v761 = vpop.f32.mrf.mxu0
      %v762 = vadd.f32 0.0, %v761
      %763 = vmatmul.bf16.gmra.mxu0 %v493
      %v764 = vpop.f32.mrf.mxu0
      %v765 = vadd.f32 0.0, %v764
      %v766 = vpop.f32.mrf.mxu0
      %v767 = vadd.f32 0.0, %v766
      %768 = vmatmul.bf16.gmra.mxu0 %v496
      %v769 = vpop.f32.mrf.mxu0
      %v770 = vadd.f32 0.0, %v769
      %v771 = vpop.f32.mrf.mxu0
      %v772 = vadd.f32 0.0, %v771
      %773 = vmatmul.bf16.gmra.mxu0 %v499
      %v774 = vpop.f32.mrf.mxu0
      %v775 = vadd.f32 0.0, %v774
      %v776 = vpop.f32.mrf.mxu0
      %v777 = vadd.f32 0.0, %v776
      %778 = vmatmul.bf16.gmra.mxu0 %v502
      %v779 = vpop.f32.mrf.mxu0
      %v780 = vadd.f32 0.0, %v779
      %v781 = vpop.f32.mrf.mxu0
      %v782 = vadd.f32 0.0, %v781
      %783 = vmatmul.bf16.gmra.mxu0 %v505
      %v784 = vpop.f32.mrf.mxu0
      %v785 = vadd.f32 0.0, %v784
      %v786 = vpop.f32.mrf.mxu0
      %v787 = vadd.f32 0.0, %v786
      %788 = vmatmul.bf16.gmra.mxu0 %v508
      %v789 = vpop.f32.mrf.mxu0
      %v790 = vadd.f32 0.0, %v789
      %v791 = vpop.f32.mrf.mxu0
      %v792 = vadd.f32 0.0, %v791
      %793 = vmatmul.bf16.gmra.mxu0 %v511
      %v794 = vpop.f32.mrf.mxu0
      %v795 = vadd.f32 0.0, %v794
      %v796 = vpop.f32.mrf.mxu0
      %v797 = vadd.f32 0.0, %v796
      %798 = vdwg.mxu0
      %799 = vmatpush.bf16.msra.mxu0 %v635
      %800 = vmatpush.bf16.msra.mxu0 %v634
      %801 = vmatpush.bf16.msra.mxu0 %v633
      %802 = vmatpush.bf16.msra.mxu0 %v632
      %803 = vmatpush.bf16.msra.mxu0 %v631
      %804 = vmatpush.bf16.msra.mxu0 %v630
      %805 = vmatpush.bf16.msra.mxu0 %v629
      %806 = vmatpush.bf16.msra.mxu0 %v628
      %807 = vmatmul.bf16.gmra.mxu0 %v467
      %v808 = vpop.f32.mrf.mxu0
      %v809 = vadd.f32 %v720, %v808
      %v810 = vpop.f32.mrf.mxu0
      %v811 = vadd.f32 %v722, %v810
      %812 = vmatmul.bf16.gmra.mxu0 %v470
      %v813 = vpop.f32.mrf.mxu0
      %v814 = vadd.f32 %v725, %v813
      %v815 = vpop.f32.mrf.mxu0
      %v816 = vadd.f32 %v727, %v815
      %817 = vmatmul.bf16.gmra.mxu0 %v473
      %v818 = vpop.f32.mrf.mxu0
      %v819 = vadd.f32 %v730, %v818
      %v820 = vpop.f32.mrf.mxu0
      %v821 = vadd.f32 %v732, %v820
      %822 = vmatmul.bf16.gmra.mxu0 %v476
      %v823 = vpop.f32.mrf.mxu0
      %v824 = vadd.f32 %v735, %v823
      %v825 = vpop.f32.mrf.mxu0
      %v826 = vadd.f32 %v737, %v825
      %827 = vmatmul.bf16.gmra.mxu0 %v479
      %v828 = vpop.f32.mrf.mxu0
      %v829 = vadd.f32 %v740, %v828
      %v830 = vpop.f32.mrf.mxu0
      %v831 = vadd.f32 %v742, %v830
      %832 = vmatmul.bf16.gmra.mxu0 %v482
      %v833 = vpop.f32.mrf.mxu0
      %v834 = vadd.f32 %v745, %v833
      %v835 = vpop.f32.mrf.mxu0
      %v836 = vadd.f32 %v747, %v835
      %837 = vmatmul.bf16.gmra.mxu0 %v485
      %v838 = vpop.f32.mrf.mxu0
      %v839 = vadd.f32 %v750, %v838
      %v840 = vpop.f32.mrf.mxu0
      %v841 = vadd.f32 %v752, %v840
      %842 = vmatmul.bf16.gmra.mxu0 %v488
      %v843 = vpop.f32.mrf.mxu0
      %v844 = vadd.f32 %v755, %v843
      %v845 = vpop.f32.mrf.mxu0
      %v846 = vadd.f32 %v757, %v845
      %847 = vmatmul.bf16.gmra.mxu0 %v491
      %v848 = vpop.f32.mrf.mxu0
      %v849 = vadd.f32 %v760, %v848
      %v850 = vpop.f32.mrf.mxu0
      %v851 = vadd.f32 %v762, %v850
      %852 = vmatmul.bf16.gmra.mxu0 %v494
      %v853 = vpop.f32.mrf.mxu0
      %v854 = vadd.f32 %v765, %v853
      %v855 = vpop.f32.mrf.mxu0
      %v856 = vadd.f32 %v767, %v855
      %857 = vmatmul.bf16.gmra.mxu0 %v497
      %v858 = vpop.f32.mrf.mxu0
      %v859 = vadd.f32 %v770, %v858
      %v860 = vpop.f32.mrf.mxu0
      %v861 = vadd.f32 %v772, %v860
      %862 = vmatmul.bf16.gmra.mxu0 %v500
      %v863 = vpop.f32.mrf.mxu0
      %v864 = vadd.f32 %v775, %v863
      %v865 = vpop.f32.mrf.mxu0
      %v866 = vadd.f32 %v777, %v865
      %867 = vmatmul.bf16.gmra.mxu0 %v503
      %v868 = vpop.f32.mrf.mxu0
      %v869 = vadd.f32 %v780, %v868
      %v870 = vpop.f32.mrf.mxu0
      %v871 = vadd.f32 %v782, %v870
      %872 = vmatmul.bf16.gmra.mxu0 %v506
      %v873 = vpop.f32.mrf.mxu0
      %v874 = vadd.f32 %v785, %v873
      %v875 = vpop.f32.mrf.mxu0
      %v876 = vadd.f32 %v787, %v875
      %877 = vmatmul.bf16.gmra.mxu0 %v509
      %v878 = vpop.f32.mrf.mxu0
      %v879 = vadd.f32 %v790, %v878
      %v880 = vpop.f32.mrf.mxu0
      %v881 = vadd.f32 %v792, %v880
      %882 = vmatmul.bf16.gmra.mxu0 %v512
      %v883 = vpop.f32.mrf.mxu0
      %v884 = vadd.f32 %v795, %v883
      %v885 = vpop.f32.mrf.mxu0
      %v886 = vadd.f32 %v797, %v885
      %887 = vdwg.mxu0
      %888 = vmatpush.bf16.msra.mxu0 0
      %889 = vmatpush.bf16.msra.mxu0 0
      %890 = vmatpush.bf16.msra.mxu0 0
      %891 = vmatpush.bf16.msra.mxu0 0
      %892 = vmatpush.bf16.msra.mxu0 0
      %893 = vmatpush.bf16.msra.mxu0 %v708
      %894 = vmatpush.bf16.msra.mxu0 %v637
      %895 = vmatpush.bf16.msra.mxu0 %v636
      %896 = vmatmul.bf16.gmra.mxu0 %v659
      %v897 = vpop.f32.mrf.mxu0
      %v898 = vadd.f32 %v809, %v897
      %v899 = vpop.f32.mrf.mxu0
      %v900 = vadd.f32 %v811, %v899
      %901 = vmatmul.bf16.gmra.mxu0 %v662
      %v902 = vpop.f32.mrf.mxu0
      %v903 = vadd.f32 %v814, %v902
      %v904 = vpop.f32.mrf.mxu0
      %v905 = vadd.f32 %v816, %v904
      %906 = vmatmul.bf16.gmra.mxu0 %v665
      %v907 = vpop.f32.mrf.mxu0
      %v908 = vadd.f32 %v819, %v907
      %v909 = vpop.f32.mrf.mxu0
      %v910 = vadd.f32 %v821, %v909
      %911 = vmatmul.bf16.gmra.mxu0 %v668
      %v912 = vpop.f32.mrf.mxu0
      %v913 = vadd.f32 %v824, %v912
      %v914 = vpop.f32.mrf.mxu0
      %v915 = vadd.f32 %v826, %v914
      %916 = vmatmul.bf16.gmra.mxu0 %v671
      %v917 = vpop.f32.mrf.mxu0
      %v918 = vadd.f32 %v829, %v917
      %v919 = vpop.f32.mrf.mxu0
      %v920 = vadd.f32 %v831, %v919
      %921 = vmatmul.bf16.gmra.mxu0 %v674
      %v922 = vpop.f32.mrf.mxu0
      %v923 = vadd.f32 %v834, %v922
      %v924 = vpop.f32.mrf.mxu0
      %v925 = vadd.f32 %v836, %v924
      %926 = vmatmul.bf16.gmra.mxu0 %v677
      %v927 = vpop.f32.mrf.mxu0
      %v928 = vadd.f32 %v839, %v927
      %v929 = vpop.f32.mrf.mxu0
      %v930 = vadd.f32 %v841, %v929
      %931 = vmatmul.bf16.gmra.mxu0 %v680
      %v932 = vpop.f32.mrf.mxu0
      %v933 = vadd.f32 %v844, %v932
      %v934 = vpop.f32.mrf.mxu0
      %v935 = vadd.f32 %v846, %v934
      %936 = vmatmul.bf16.gmra.mxu0 %v683
      %v937 = vpop.f32.mrf.mxu0
      %v938 = vadd.f32 %v849, %v937
      %v939 = vpop.f32.mrf.mxu0
      %v940 = vadd.f32 %v851, %v939
      %941 = vmatmul.bf16.gmra.mxu0 %v686
      %v942 = vpop.f32.mrf.mxu0
      %v943 = vadd.f32 %v854, %v942
      %v944 = vpop.f32.mrf.mxu0
      %v945 = vadd.f32 %v856, %v944
      %946 = vmatmul.bf16.gmra.mxu0 %v689
      %v947 = vpop.f32.mrf.mxu0
      %v948 = vadd.f32 %v859, %v947
      %v949 = vpop.f32.mrf.mxu0
      %v950 = vadd.f32 %v861, %v949
      %951 = vmatmul.bf16.gmra.mxu0 %v692
      %v952 = vpop.f32.mrf.mxu0
      %v953 = vadd.f32 %v864, %v952
      %v954 = vpop.f32.mrf.mxu0
      %v955 = vadd.f32 %v866, %v954
      %956 = vmatmul.bf16.gmra.mxu0 %v695
      %v957 = vpop.f32.mrf.mxu0
      %v958 = vadd.f32 %v869, %v957
      %v959 = vpop.f32.mrf.mxu0
      %v960 = vadd.f32 %v871, %v959
      %961 = vmatmul.bf16.gmra.mxu0 %v698
      %v962 = vpop.f32.mrf.mxu0
      %v963 = vadd.f32 %v874, %v962
      %v964 = vpop.f32.mrf.mxu0
      %v965 = vadd.f32 %v876, %v964
      %966 = vmatmul.bf16.gmra.mxu0 %v701
      %v967 = vpop.f32.mrf.mxu0
      %v968 = vadd.f32 %v879, %v967
      %v969 = vpop.f32.mrf.mxu0
      %v970 = vadd.f32 %v881, %v969
      %971 = vmatmul.bf16.gmra.mxu0 %v704
      %v972 = vpop.f32.mrf.mxu0
      %v973 = vadd.f32 %v884, %v972
      %v974 = vpop.f32.mrf.mxu0
      %v975 = vadd.f32 %v886, %v974
      %976 = vdwg.mxu0
      %v977 = vld [vmem:[%s2] sm:$0x1]
      %v979 = vperm.slane %v977, 0
      %v981 = vmul.f32 %v898, %v979
      %v982 = vmul.f32 %v900, %v979
      %v983 = vmul.f32 %v903, %v979
      %v984 = vmul.f32 %v905, %v979
      %v985 = vmul.f32 %v908, %v979
      %v986 = vmul.f32 %v910, %v979
      %v987 = vmul.f32 %v913, %v979
      %v988 = vmul.f32 %v915, %v979
      %v989 = vmul.f32 %v918, %v979
      %v990 = vmul.f32 %v920, %v979
      %v991 = vmul.f32 %v923, %v979
      %v992 = vmul.f32 %v925, %v979
      %v993 = vmul.f32 %v928, %v979
      %v994 = vmul.f32 %v930, %v979
      %v995 = vmul.f32 %v933, %v979
      %v996 = vmul.f32 %v935, %v979
      %v997 = vmul.f32 %v938, %v979
      %v998 = vmul.f32 %v940, %v979
      %v999 = vmul.f32 %v943, %v979
      %v1000 = vmul.f32 %v945, %v979
      %v1001 = vmul.f32 %v948, %v979
      %v1002 = vmul.f32 %v950, %v979
      %v1003 = vmul.f32 %v953, %v979
      %v1004 = vmul.f32 %v955, %v979
      %v1005 = vmul.f32 %v958, %v979
      %v1006 = vmul.f32 %v960, %v979
      %v1007 = vmul.f32 %v963, %v979
      %v1008 = vmul.f32 %v965, %v979
      %v1009 = vmul.f32 %v968, %v979
      %v1010 = vmul.f32 %v970, %v979
      %v1011 = vmul.f32 %v973, %v979
      %v1012 = vmul.f32 %v975, %v979
      %v1013 = vld [vmem:[%s3] sm:$0x1]
      %v1015 = vperm.slane %v1013, 0
      %v1017 = vadd.f32 %v981, %v1015
      %v1018 = vadd.f32 %v982, %v1015
      %v1019 = vadd.f32 %v983, %v1015
      %v1020 = vadd.f32 %v984, %v1015
      %v1021 = vadd.f32 %v985, %v1015
      %v1022 = vadd.f32 %v986, %v1015
      %v1023 = vadd.f32 %v987, %v1015
      %v1024 = vadd.f32 %v988, %v1015
      %v1025 = vadd.f32 %v989, %v1015
      %v1026 = vadd.f32 %v990, %v1015
      %v1027 = vadd.f32 %v991, %v1015
      %v1028 = vadd.f32 %v992, %v1015
      %v1029 = vadd.f32 %v993, %v1015
      %v1030 = vadd.f32 %v994, %v1015
      %v1031 = vadd.f32 %v995, %v1015
      %v1032 = vadd.f32 %v996, %v1015
      %v1033 = vadd.f32 %v997, %v1015
      %v1034 = vadd.f32 %v998, %v1015
      %v1035 = vadd.f32 %v999, %v1015
      %v1036 = vadd.f32 %v1000, %v1015
      %v1037 = vadd.f32 %v1001, %v1015
      %v1038 = vadd.f32 %v1002, %v1015
      %v1039 = vadd.f32 %v1003, %v1015
      %v1040 = vadd.f32 %v1004, %v1015
      %v1041 = vadd.f32 %v1005, %v1015
      %v1042 = vadd.f32 %v1006, %v1015
      %v1043 = vadd.f32 %v1007, %v1015
      %v1044 = vadd.f32 %v1008, %v1015
      %v1045 = vadd.f32 %v1009, %v1015
      %v1046 = vadd.f32 %v1010, %v1015
      %v1047 = vadd.f32 %v1011, %v1015
      %v1048 = vadd.f32 %v1012, %v1015
      %v1049 = vmax.f32 %v1017, 0.0
      %v1050 = vmax.f32 %v1018, 0.0
      %v1051 = vmax.f32 %v1019, 0.0
      %v1052 = vmax.f32 %v1020, 0.0
      %v1053 = vmax.f32 %v1021, 0.0
      %v1054 = vmax.f32 %v1022, 0.0
      %v1055 = vmax.f32 %v1023, 0.0
      %v1056 = vmax.f32 %v1024, 0.0
      %v1057 = vmax.f32 %v1025, 0.0
      %v1058 = vmax.f32 %v1026, 0.0
      %v1059 = vmax.f32 %v1027, 0.0
      %v1060 = vmax.f32 %v1028, 0.0
      %v1061 = vmax.f32 %v1029, 0.0
      %v1062 = vmax.f32 %v1030, 0.0
      %v1063 = vmax.f32 %v1031, 0.0
      %v1064 = vmax.f32 %v1032, 0.0
      %v1065 = vmax.f32 %v1033, 0.0
      %v1066 = vmax.f32 %v1034, 0.0
      %v1067 = vmax.f32 %v1035, 0.0
      %v1068 = vmax.f32 %v1036, 0.0
      %v1069 = vmax.f32 %v1037, 0.0
      %v1070 = vmax.f32 %v1038, 0.0
      %v1071 = vmax.f32 %v1039, 0.0
      %v1072 = vmax.f32 %v1040, 0.0
      %v1073 = vmax.f32 %v1041, 0.0
      %v1074 = vmax.f32 %v1042, 0.0
      %v1075 = vmax.f32 %v1043, 0.0
      %v1076 = vmax.f32 %v1044, 0.0
      %v1077 = vmax.f32 %v1045, 0.0
      %v1078 = vmax.f32 %v1046, 0.0
      %v1079 = vmax.f32 %v1047, 0.0
      %v1080 = vmax.f32 %v1048, 0.0
      %v1081 = vpack.c.bf16 %v1049, %v1049
      %v1082 = vpack.c.bf16 %v1050, %v1050
      %v1083 = vpack.c.bf16 %v1051, %v1051
      %v1084 = vpack.c.bf16 %v1052, %v1052
      %v1085 = vpack.c.bf16 %v1053, %v1053
      %v1086 = vpack.c.bf16 %v1054, %v1054
      %v1087 = vpack.c.bf16 %v1055, %v1055
      %v1088 = vpack.c.bf16 %v1056, %v1056
      %v1089 = vpack.c.bf16 %v1057, %v1057
      %v1090 = vpack.c.bf16 %v1058, %v1058
      %v1091 = vpack.c.bf16 %v1059, %v1059
      %v1092 = vpack.c.bf16 %v1060, %v1060
      %v1093 = vpack.c.bf16 %v1061, %v1061
      %v1094 = vpack.c.bf16 %v1062, %v1062
      %v1095 = vpack.c.bf16 %v1063, %v1063
      %v1096 = vpack.c.bf16 %v1064, %v1064
      %v1097 = vpack.c.bf16 %v1065, %v1065
      %v1098 = vpack.c.bf16 %v1066, %v1066
      %v1099 = vpack.c.bf16 %v1067, %v1067
      %v1100 = vpack.c.bf16 %v1068, %v1068
      %v1101 = vpack.c.bf16 %v1069, %v1069
      %v1102 = vpack.c.bf16 %v1070, %v1070
      %v1103 = vpack.c.bf16 %v1071, %v1071
      %v1104 = vpack.c.bf16 %v1072, %v1072
      %v1105 = vpack.c.bf16 %v1073, %v1073
      %v1106 = vpack.c.bf16 %v1074, %v1074
      %v1107 = vpack.c.bf16 %v1075, %v1075
      %v1108 = vpack.c.bf16 %v1076, %v1076
      %v1109 = vpack.c.bf16 %v1077, %v1077
      %v1110 = vpack.c.bf16 %v1078, %v1078
      %v1111 = vpack.c.bf16 %v1079, %v1079
      %v1112 = vpack.c.bf16 %v1080, %v1080
      %vm1113 = vcmask 519168
      %1114 = vst.msk [vmem:[%s202] sm:$0xf] %vm1113, %v1081
      %1115 = vst.msk [vmem:[%s202 + $0x4] sm:$0xf] %vm1113, %v1082
      %1116 = vst.msk [vmem:[%s202 + $0x8] sm:$0xf] %vm1113, %v1083
      %1117 = vst.msk [vmem:[%s202 + $0xc] sm:$0xf] %vm1113, %v1084
      %1118 = vst.msk [vmem:[%s202 + $0x10] sm:$0xf] %vm1113, %v1085
      %1119 = vst.msk [vmem:[%s202 + $0x14] sm:$0xf] %vm1113, %v1086
      %1120 = vst.msk [vmem:[%s202 + $0x18] sm:$0xf] %vm1113, %v1087
      %1121 = vst.msk [vmem:[%s202 + $0x1c] sm:$0xf] %vm1113, %v1088
      %1122 = vst.msk [vmem:[%s202 + $0x20] sm:$0xf] %vm1113, %v1089
      %1123 = vst.msk [vmem:[%s202 + $0x24] sm:$0xf] %vm1113, %v1090
      %1124 = vst.msk [vmem:[%s202 + $0x28] sm:$0xf] %vm1113, %v1091
      %1125 = vst.msk [vmem:[%s202 + $0x2c] sm:$0xf] %vm1113, %v1092
      %1126 = vst.msk [vmem:[%s202 + $0x30] sm:$0xf] %vm1113, %v1093
      %1127 = vst.msk [vmem:[%s202 + $0x34] sm:$0xf] %vm1113, %v1094
      %1128 = vst.msk [vmem:[%s202 + $0x38] sm:$0xf] %vm1113, %v1095
      %1129 = vst.msk [vmem:[%s202 + $0x3c] sm:$0xf] %vm1113, %v1096
      %1130 = vst.msk [vmem:[%s202 + $0x40] sm:$0xf] %vm1113, %v1097
      %1131 = vst.msk [vmem:[%s202 + $0x44] sm:$0xf] %vm1113, %v1098
      %1132 = vst.msk [vmem:[%s202 + $0x48] sm:$0xf] %vm1113, %v1099
      %1133 = vst.msk [vmem:[%s202 + $0x4c] sm:$0xf] %vm1113, %v1100
      %1134 = vst.msk [vmem:[%s202 + $0x50] sm:$0xf] %vm1113, %v1101
      %1135 = vst.msk [vmem:[%s202 + $0x54] sm:$0xf] %vm1113, %v1102
      %1136 = vst.msk [vmem:[%s202 + $0x58] sm:$0xf] %vm1113, %v1103
      %1137 = vst.msk [vmem:[%s202 + $0x5c] sm:$0xf] %vm1113, %v1104
      %1138 = vst.msk [vmem:[%s202 + $0x60] sm:$0xf] %vm1113, %v1105
      %1139 = vst.msk [vmem:[%s202 + $0x64] sm:$0xf] %vm1113, %v1106
      %1140 = vst.msk [vmem:[%s202 + $0x68] sm:$0xf] %vm1113, %v1107
      %1141 = vst.msk [vmem:[%s202 + $0x6c] sm:$0xf] %vm1113, %v1108
      %1142 = vst.msk [vmem:[%s202 + $0x70] sm:$0xf] %vm1113, %v1109
      %1143 = vst.msk [vmem:[%s202 + $0x74] sm:$0xf] %vm1113, %v1110
      %1144 = vst.msk [vmem:[%s202 + $0x78] sm:$0xf] %vm1113, %v1111
      %1145 = vst.msk [vmem:[%s202 + $0x7c] sm:$0xf] %vm1113, %v1112
      %s1146 = smul.u32 32, %s15
      %p1147 = scmp.lt.s32.totalorder %s1146, 255
      %s1148 = scalar_select %p1147, %s1146, 255
      %s1149 = smul.addr %s1148, 4
      %s1150 = scalar_lea.vmem %s4, %s1149
      // Predicated region
      $region37: #{tpu_custom_call.1} parent=35 // pred_check
        %p1151 = pneg %p122
      $region38: #{tpu_custom_call.1} parent=35 // pred_check_branch
        %1153 = sbr.rel (%p1151) target = $region40
      $region39: #{tpu_custom_call.1} parent=35 // pred_region
        %s1154 = smul.u32 32, %s15
      $region40: #{tpu_custom_call.1} parent=35 // pred_fallthru
        _
    $region36: #{tpu_custom_call.1} parent=5 // pred_fallthru
      _
    %p1155 = scmp.le.s32.totalorder 2, %s10
    // Predicated region
    $region41: #{tpu_custom_call.1} parent=5 // pred_check
      %p1156 = pneg %p1155
    $region42: #{tpu_custom_call.1} parent=5 // pred_check_branch
      %1158 = sbr.rel (%p1156) target = $region44
    $region43: #{tpu_custom_call.1} parent=5 // pred_region
      %s1159 = ssub.s32 %s10, 2
      // Predicated region
      $region45: #{tpu_custom_call.1} parent=43 // pred_check
        %p1160 = pneg %p128
      $region46: #{tpu_custom_call.1} parent=43 // pred_check_branch
        %1162 = sbr.rel (%p1160) target = $region48
      $region47: #{tpu_custom_call.1} parent=43 // pred_region
        %s1163 = smul.u32 32, %s16
        %p1164 = scmp.lt.s32.totalorder %s1163, 255
        %s1165 = scalar_select %p1164, %s1163, 255
        %s1166 = smul.addr %s1165, 4
        %s1167 = scalar_lea.vmem %s4, %s1166
      $region48: #{tpu_custom_call.1} parent=43 // pred_fallthru
        _
    $region44: #{tpu_custom_call.1} parent=5 // pred_fallthru
      _
  $region6: #{tpu_custom_call.1} parent=0 // loop_footer
    %s14 = sadd.s32 1, %s10
  $region7: #{tpu_custom_call.1} parent=0 // loop_footer_branch
    %9 = sbr.rel target = $region3
  $region8: #{tpu_custom_call.1} parent=0 // loop_exit
    _

</llo_original>
